<compile_context>
chip_gen: v7x
topology: tpu7x:2x2x1
jax: 0.10.0
libtpu: 0.0.40
codegen_flags: <defaults>
</compile_context>

<pallas_src>
import jax
import jax.numpy as jnp
from jax import lax
from jax.experimental import pallas as pl
from jax.experimental.pallas import tpu as pltpu

_HI = lax.Precision.HIGHEST
_LANES = 128
_FEATS = 2
_ROW_GROUP = 8 * _LANES  # pad N to a multiple of 1024 -> G is a multiple of 8


def _affine_kernel(b_ref, x_ref, w_ref, o_ref):
    # b_ref: SMEM f32[1]         folded bias
    # x_ref: VMEM f32[Br, 256]   128 batch rows / sublane-row, features on lanes
    # w_ref: VMEM f32[256, 128]  de-interleave + weight matrix (constant tile)
    # o_ref: VMEM f32[Br, 128]
    o_ref[...] = (
        jnp.dot(x_ref[...], w_ref[...], preferred_element_type=jnp.float32)
        + b_ref[0]
    )


def _fold_params(params):
    """Exactly fold the three linear layers into y = x @ W + b (f32)."""
    w12 = jnp.dot(params["w1"], params["w2"], precision=_HI)
    w = jnp.dot(w12, params["w3"], precision=_HI)                          # [2, 1]
    b12 = jnp.dot(params["b1"], params["w2"], precision=_HI) + params["b2"]
    b = jnp.dot(b12, params["w3"], precision=_HI) + params["b3"]           # [1, 1]
    return w.reshape(_FEATS).astype(jnp.float32), b.reshape(1).astype(jnp.float32)


def _default_block_rows():
    # ~3 MiB moved per grid step is enough to sit near HBM roofline on
    # v5e/v6e; v7x-class chips (64 MiB VMEM/TC, ~3.2 TB/s HBM) amortize the
    # fixed per-step cost better with ~6 MiB steps.
    try:
        if pltpu.get_tpu_info().vmem_capacity_bytes <= 64 * 1024 * 1024:
            return 4096
    except Exception:
        pass
    return 2048


def _pick_block_rows(G, max_rows):
    if G <= 16:
        return G  # single block; legal because it equals the full array dim
    # >= 2 grid steps (v7x megacore split), blocks a multiple of 8 sublanes.
    half_rounded = pl.cdiv(pl.cdiv(G, 2), 8) * 8
    return max(8, min(max_rows, half_rounded))


def net_forward(x, params, block_rows=None, min_pallas_rows=512):
    """x: [N, 2] float32 -> [N, 1] float32 (same math as the torch Net)."""
    n, f = x.shape
    assert f == _FEATS
    w, b = _fold_params(params)
    x = x.astype(jnp.float32)

    # Tiny batches: pad/launch overhead can never be amortized -- let XLA fuse
    # the two-FMA affine directly.
    if n < min_pallas_rows:
        return jnp.dot(x, w.reshape(_FEATS, 1), precision=_HI) + b

    if block_rows is None:
        block_rows = _default_block_rows()

    n_pad = pl.cdiv(n, _ROW_GROUP) * _ROW_GROUP
    if n_pad != n:
        x = jnp.pad(x, ((0, n_pad - n), (0, 0)))
    G = n_pad // _LANES

    # Free reshape of the contiguous row-major buffer: row g = 128 batch
    # elements with their two features interleaved along the 256 lanes.
    x_view = x.reshape(G, _FEATS * _LANES)

    # Constant de-interleave + weight matrix: column j has W0 at row 2j and W1
    # at row 2j+1, so (x_view @ wmat)[g, j] = x[128g+j,0]*W0 + x[128g+j,1]*W1.
    wmat = jnp.kron(jnp.eye(_LANES, dtype=jnp.float32), w.reshape(_FEATS, 1))

    br = _pick_block_rows(G, block_rows)
    grid = (pl.cdiv(G, br),)  # boundary block (if any) is masked by Pallas

    out = pl.pallas_call(
        _affine_kernel,
        out_shape=jax.ShapeDtypeStruct((G, _LANES), jnp.float32),
        grid=grid,
        in_specs=[
            pl.BlockSpec(memory_space=pltpu.MemorySpace.SMEM),            # bias
            pl.BlockSpec((br, _FEATS * _LANES), lambda i: (i, 0)),        # x tile
            pl.BlockSpec((_FEATS * _LANES, _LANES), lambda i: (0, 0)),    # wmat (loaded once)
        ],
        out_specs=pl.BlockSpec((br, _LANES), lambda i: (i, 0)),
        compiler_params=pltpu.CompilerParams(
            dimension_semantics=("parallel",),
        ),
        cost_estimate=pl.CostEstimate(
            flops=2 * G * _FEATS * _LANES * _LANES,
            transcendentals=0,
            bytes_accessed=4 * (G * _FEATS * _LANES + G * _LANES
                                + _FEATS * _LANES * _LANES + 1),
        ),
    )(b, x_view, wmat)

    return out.reshape(n_pad, 1)[:n]


def init_params(key):
    """Deterministic init mirroring torch.nn.Linear's U(-1/sqrt(fan_in), ...)."""
    def linear(k, fan_in, fan_out):
        kw, kb = jax.random.split(k)
        bound = 1.0 / jnp.sqrt(jnp.float32(fan_in))
        wgt = jax.random.uniform(kw, (fan_in, fan_out), jnp.float32, -bound, bound)
        bia = jax.random.uniform(kb, (1, fan_out), jnp.float32, -bound, bound)
        return wgt, bia

    k1, k2, k3 = jax.random.split(key, 3)
    w1, b1 = linear(k1, 2, 8)
    w2, b2 = linear(k2, 8, 4)
    w3, b3 = linear(k3, 4, 1)
    return dict(w1=w1, b1=b1, w2=w2, b2=b2, w3=w3, b3=b3)


def net_reference(x, params):
    """Plain-JAX layer-by-layer reference (accurate f32)."""
    h = jnp.dot(x, params["w1"], precision=_HI) + params["b1"]
    h = jnp.dot(h, params["w2"], precision=_HI) + params["b2"]
    return jnp.dot(h, params["w3"], precision=_HI) + params["b3"]


if __name__ == "__main__":
    key = jax.random.PRNGKey(0)
    kx, kp = jax.random.split(key)
    params = init_params(kp)

    fwd = jax.jit(net_forward)

    # Batch that goes through the Pallas kernel: G=32 row-groups, block_rows=16,
    # a 2-step "parallel" grid with fully (8,128)-aligned, lane-dense tiles.
    x_big = jax.random.normal(kx, (4096, _FEATS), jnp.float32)
    out_big = jax.block_until_ready(fwd(x_big, params))
    ref_big = net_reference(x_big, params)
    assert out_big.shape == (4096, 1)
    assert jnp.allclose(out_big, ref_big, atol=1e-4, rtol=1e-4), "kernel mismatch"

    # Tiny batch at the module's natural scale exercises the fused fast path.
    x_small = jax.random.normal(jax.random.fold_in(kx, 1), (8, _FEATS), jnp.float32)
    out_small = jax.block_until_ready(fwd(x_small, params))
    assert out_small.shape == (8, 1)
    assert jnp.allclose(out_small, net_reference(x_small, params),
                        atol=1e-4, rtol=1e-4), "fast-path mismatch"

    print("KERNEL_OK")
</pallas_src>

<mosaic_0001>
module attributes {stable_mosaic.version = 11 : i64} {
  func.func @_affine_kernel(%arg0: i32, %arg1: memref<1xf32, #tpu.memory_space<smem>>, %arg2: memref<16x256xf32, #tpu.memory_space<vmem>>, %arg3: memref<256x128xf32, #tpu.memory_space<vmem>>, %arg4: memref<16x128xf32, #tpu.memory_space<vmem>>) attributes {dimension_semantics = [#tpu.dimension_semantics<parallel>], iteration_bounds = array<i64: 2>, scalar_prefetch = 0 : i64, scratch_operands = 0 : i64, tpu.core_type = #tpu.core_type<tc>, window_params = [{transform_indices = @transform_0, window_bounds = array<i64: 1>}, {transform_indices = @transform_1, window_bounds = array<i64: 16, 256>}, {pipeline_mode = #tpu.pipeline_mode<synchronous>, transform_indices = @transform_2, window_bounds = array<i64: 256, 128>}, {transform_indices = @transform_3, window_bounds = array<i64: 16, 128>}]} {
    %c0 = arith.constant 0 : index
    %c0_0 = arith.constant 0 : index
    %0 = vector.load %arg2[%c0, %c0_0] : memref<16x256xf32, #tpu.memory_space<vmem>>, vector<16x256xf32>
    %c0_1 = arith.constant 0 : index
    %c0_2 = arith.constant 0 : index
    %1 = vector.load %arg3[%c0_1, %c0_2] : memref<256x128xf32, #tpu.memory_space<vmem>>, vector<256x128xf32>
    %cst = arith.constant dense<0.000000e+00> : vector<16x128xf32>
    %2 = tpu.matmul %0, %1, %cst {dimension_numbers = #tpu.dot_dimension_numbers<[1], [0], [0], [1], [0, 0, 1, 1], [], []>} : vector<16x256xf32>, vector<256x128xf32>, vector<16x128xf32> -> vector<16x128xf32>
    %c0_3 = arith.constant 0 : index
    %3 = memref.load %arg1[%c0_3] : memref<1xf32, #tpu.memory_space<smem>>
    %4 = vector.broadcast %3 : f32 to vector<16x128xf32>
    %5 = arith.addf %2, %4 : vector<16x128xf32>
    %c0_4 = arith.constant 0 : index
    %c0_5 = arith.constant 0 : index
    %6 = vector.load %arg4[%c0_4, %c0_5] : memref<16x128xf32, #tpu.memory_space<vmem>>, vector<16x128xf32>
    tpu.vector_store %arg4[%c0_4, %c0_5], %5 {strides = array<i32>} : memref<16x128xf32, #tpu.memory_space<vmem>>, vector<16x128xf32>,
    return
  }
  func.func @transform_0(%arg0: i32) -> i32 {
    %c0_i32 = arith.constant 0 : i32
    %c0_i32_0 = arith.constant 0 : i32
    return %c0_i32 : i32
  }
  func.func @transform_1(%arg0: i32) -> (i32, i32) {
    %c0_i32 = arith.constant 0 : i32
    %c0_i32_0 = arith.constant 0 : i32
    return %arg0, %c0_i32 : i32, i32
  }
  func.func @transform_2(%arg0: i32) -> (i32, i32) {
    %c0_i32 = arith.constant 0 : i32
    %c0_i32_0 = arith.constant 0 : i32
    %c0_i32_1 = arith.constant 0 : i32
    return %c0_i32, %c0_i32_0 : i32, i32
  }
  func.func @transform_3(%arg0: i32) -> (i32, i32) {
    %c0_i32 = arith.constant 0 : i32
    %c0_i32_0 = arith.constant 0 : i32
    return %arg0, %c0_i32 : i32, i32
  }
}

</mosaic_0001>

<llo_original>
// kernel: net_forward.1
$region0: #{net_forward.1}
  #allocation0 [shape = 'u32[]', space=smem, size = 0x4, offset = 0x4, fixed_abs, tag = 'smem constant byte address 0x4 - core index']
  #allocation1 [shape = 'u32[144,128]{1,0:T(1,128)}', space=vmem, size = 0x12000, scoped, tag = 'internal scratch']
  #allocation2 [shape = 'f32[1]{0:T(128)S(6)}', space=smem, size = 0x200, scoped, tag = 'scoped memory for net_forward.1']
  %s0 = inlined_call_operand.<no memory space> [shape: f32[1], index: 0, kind: input, shape index: {}]
  %s1 = inlined_call_operand.vmem [shape: f32[32,256], index: 1, kind: input, shape index: {}]
  %s2 = inlined_call_operand.vmem [shape: f32[256,128], index: 2, kind: input, shape index: {}]
  %s3 = inlined_call_operand.hbm [shape: f32[32,128], index: 3, kind: output, shape index: {}]
  %s4 = sld [smem:[#allocation0]]
  $region45: #{net_forward.1} parent=0
    _
  %s6 = ssub.s32 1, %s4
  %s7 = scalar_select 0, %s6, %s4
  %8 = sst [smem:[#allocation2]] %s0
  $region1: #{net_forward.1} parent=0
    #allocation3 [shape = 'u8[16384]{0}', space=vmem, size = 0x4000, scoped, tag = 'output window, operand 0']
    #allocation4 [shape = 's32[2]{0}', space=sflag, size = 0x8, scoped, tag = 'scoped memory for net_forward.1']
    %9 = vsyncpa [#allocation4], 0
    %s10 = scalar_lea.sflag [#allocation4], 1
    %11 = vsyncpa %s10, 0
    loop: start=0, step=1, limit=4
    $region2: #{net_forward.1} parent=1 // loop_pre_header
      _
    $region3: #{net_forward.1} parent=1 // loop_header
      %s13 = sphi 0, %s17
      %p14 = scmp.ge.s32.totalorder %s13, 4
      %s21 = sphi 0, %s21
      %s23 = sphi 0, %s21
      %s24 = sphi 0, %s23
      %s38 = sphi 0, %s24
      %s44 = sphi 0, %s46
      %s47 = sphi 0, %s44
      %s48 = sphi 0, %s47
      %s64 = sphi 0, %s48
      %s68 = sphi 0, %s68
      %s70 = sphi 0, %s68
      %s71 = sphi 0, %s70
      %s85 = sphi 0, %s71
      %s91 = sphi 0, %s93
      %s94 = sphi 0, %s91
      %s95 = sphi 0, %s94
      %s111 = sphi 0, %s95
    $region4: #{net_forward.1} parent=1 // loop_header_branch
      %16 = sbr.rel (%p14) target = $region8
    $region5: #{net_forward.1} parent=1 // loop_body
      %s18 = ssub.s32 %s13, 1
      %s19 = ssub.s32 %s13, 2
      %s20 = sadd.s32 %s13, 1
      %s22 = sadd.s32 %s21, 1
      %p25 = scmp.eq.s32.totalorder %s13, 1
      %p26 = scmp.ne.s32.totalorder %s21, %s23
      %p27 = scmp.eq.s32.totalorder %s13, 0
      %p28 = por %p26, %p27
      %p29 = scmp.ne.s32.totalorder %s21, %s23
      %p30 = scmp.eq.s32.totalorder %s18, 1
      %p31 = por %p29, %p30
      %p32 = scmp.ne.s32.totalorder %s23, %s24
      %p33 = scmp.eq.s32.totalorder %s18, 0
      %p34 = por %p32, %p33
      %p35 = scmp.ne.s32.totalorder %s23, %s24
      %p36 = scmp.eq.s32.totalorder %s19, 1
      %p37 = por %p35, %p36
      %p39 = scmp.ne.s32.totalorder %s24, %s38
      %p40 = scmp.eq.s32.totalorder %s19, 0
      %p41 = por %p39, %p40
      %s42 = ssub.s32 %s13, %s20
      %p43 = scmp.eq.s32.totalorder %s42, 0
      %s45 = sadd.s32 %s44, 1
      %s46 = scalar_select %p43, %s44, %s45
      %p49 = pneg %p43
      %p50 = scmp.eq.s32.totalorder %s13, 1
      %p51 = por %p49, %p50
      %p52 = scmp.ne.s32.totalorder %s44, %s47
      %p53 = scmp.eq.s32.totalorder %s13, 0
      %p54 = por %p52, %p53
      %p55 = scmp.ne.s32.totalorder %s44, %s47
      %p56 = scmp.eq.s32.totalorder %s18, 1
      %p57 = por %p55, %p56
      %p58 = scmp.ne.s32.totalorder %s47, %s48
      %p59 = scmp.eq.s32.totalorder %s18, 0
      %p60 = por %p58, %p59
      %p61 = scmp.ne.s32.totalorder %s47, %s48
      %p62 = scmp.eq.s32.totalorder %s19, 1
      %p63 = por %p61, %p62
      %p65 = scmp.ne.s32.totalorder %s48, %s64
      %p66 = scmp.eq.s32.totalorder %s19, 0
      %p67 = por %p65, %p66
      %s69 = sadd.s32 %s68, 1
      %p72 = scmp.eq.s32.totalorder %s13, 1
      %p73 = scmp.ne.s32.totalorder %s68, %s70
      %p74 = scmp.eq.s32.totalorder %s13, 0
      %p75 = por %p73, %p74
      %p76 = scmp.ne.s32.totalorder %s68, %s70
      %p77 = scmp.eq.s32.totalorder %s18, 1
      %p78 = por %p76, %p77
      %p79 = scmp.ne.s32.totalorder %s70, %s71
      %p80 = scmp.eq.s32.totalorder %s18, 0
      %p81 = por %p79, %p80
      %p82 = scmp.ne.s32.totalorder %s70, %s71
      %p83 = scmp.eq.s32.totalorder %s19, 1
      %p84 = por %p82, %p83
      %p86 = scmp.ne.s32.totalorder %s71, %s85
      %p87 = scmp.eq.s32.totalorder %s19, 0
      %p88 = por %p86, %p87
      %s89 = ssub.s32 %s13, %s20
      %p90 = scmp.eq.s32.totalorder %s89, 0
      %s92 = sadd.s32 %s91, 1
      %s93 = scalar_select %p90, %s91, %s92
      %p96 = pneg %p90
      %p97 = scmp.eq.s32.totalorder %s13, 1
      %p98 = por %p96, %p97
      %p99 = scmp.ne.s32.totalorder %s91, %s94
      %p100 = scmp.eq.s32.totalorder %s13, 0
      %p101 = por %p99, %p100
      %p102 = scmp.ne.s32.totalorder %s91, %s94
      %p103 = scmp.eq.s32.totalorder %s18, 1
      %p104 = por %p102, %p103
      %p105 = scmp.ne.s32.totalorder %s94, %s95
      %p106 = scmp.eq.s32.totalorder %s18, 0
      %p107 = por %p105, %p106
      %p108 = scmp.ne.s32.totalorder %s94, %s95
      %p109 = scmp.eq.s32.totalorder %s19, 1
      %p110 = por %p108, %p109
      %p112 = scmp.ne.s32.totalorder %s95, %s111
      %p113 = scmp.eq.s32.totalorder %s19, 0
      %p114 = por %p112, %p113
      %p115 = scmp.le.s32.totalorder 1, %s13
      %p116 = scmp.lt.s32.totalorder %s13, 3
      %p117 = pnand %p115, %p116
      %p118 = pneg %p117
      // Predicated region
      $region9: #{net_forward.1} parent=5 // pred_check
        _
      $region10: #{net_forward.1} parent=5 // pred_check_branch
        %120 = sbr.rel (%p117) target = $region12
      $region11: #{net_forward.1} parent=5 // pred_region
        %s121 = ssub.s32 %s13, 1
        // Predicated region
        $region13: #{net_forward.1} parent=11 // pred_check
          %p122 = pneg %p34
        $region14: #{net_forward.1} parent=11 // pred_check_branch
          %124 = sbr.rel (%p122) target = $region16
        $region15: #{net_forward.1} parent=11 // pred_region
          _
        $region16: #{net_forward.1} parent=11 // pred_fallthru
          _
        // Predicated region
        $region17: #{net_forward.1} parent=11 // pred_check
          %p125 = pneg %p81
        $region18: #{net_forward.1} parent=11 // pred_check_branch
          %127 = sbr.rel (%p125) target = $region20
        $region19: #{net_forward.1} parent=11 // pred_region
          _
        $region20: #{net_forward.1} parent=11 // pred_fallthru
          _
      $region12: #{net_forward.1} parent=5 // pred_fallthru
        _
      %p128 = scmp.lt.s32.totalorder %s13, 2
      // Predicated region
      $region21: #{net_forward.1} parent=5 // pred_check
        %p129 = pneg %p128
      $region22: #{net_forward.1} parent=5 // pred_check_branch
        %131 = sbr.rel (%p129) target = $region24
      $region23: #{net_forward.1} parent=5 // pred_region
        // Predicated region
        $region25: #{net_forward.1} parent=23 // pred_check
          %p132 = pneg %p54
        $region26: #{net_forward.1} parent=23 // pred_check_branch
          %134 = sbr.rel (%p132) target = $region28
        $region27: #{net_forward.1} parent=23 // pred_region
          %s135 = smul.u32 2, %s13
          %p136 = scmp.lt.s32.totalorder %s135, 3
          %s137 = scalar_select %p136, %s135, 3
          %s138 = smul.addr %s137, 2
          %s139 = smul.addr %s138, 8
          %s140 = scalar_lea.vmem %s1, %s139
          %s141 = smul.u32 2, %s13
        $region28: #{net_forward.1} parent=23 // pred_fallthru
          _
      $region24: #{net_forward.1} parent=5 // pred_fallthru
        _
      %p142 = scmp.le.s32.totalorder 1, %s13
      %p143 = scmp.lt.s32.totalorder %s13, 3
      %p144 = pnand %p142, %p143
      %p145 = pneg %p144
      // Predicated region
      $region29: #{net_forward.1} parent=5 // pred_check
        _
      $region30: #{net_forward.1} parent=5 // pred_check_branch
        %147 = sbr.rel (%p144) target = $region32
      $region31: #{net_forward.1} parent=5 // pred_region
        %s148 = ssub.s32 %s13, 1
        %p149 = pneg %p34
        %p150 = pneg %p31
        %s151 = smul.u32 2, %s18
        %p152 = scmp.lt.s32.totalorder %s151, 3
        %s153 = scalar_select %p152, %s151, 3
        %s154 = smul.addr %s153, 2
        %s155 = smul.addr %s154, 8
        %s156 = scalar_lea.vmem %s1, %s155
        %p157 = pneg %p60
        %p158 = pneg %p57
        %p159 = pneg %p81
        %p160 = pneg %p78
        %p161 = pneg %p107
        %p162 = pneg %p104
        %s163 = sand.u32 %s94, 1
        %s164 = scalar_lea.sflag [#allocation4], %s163
        %s165 = sand.u32 %s94, 1
        %s166 = smul.addr %s165, 16
        %s167 = scalar_lea.vmem [#allocation3], %s166
        %s168 = smul.u32 2, %s18
        %p169 = scmp.lt.s32.totalorder %s168, 3
        %s170 = scalar_select %p169, %s168, 3
        %s171 = smul.addr %s170, 2
        %s172 = smul.addr %s171, 8
        %s173 = scalar_lea.vmem %s1, %s172
        %s174 = smul.u32 2, %s18
        %s175 = smul.u32 2, %s18
        %v176 = vld [vmem:[%s173] sm:$0xff]
        %v177 = vld [vmem:[%s173 + $0x8] sm:$0xff]
        %v178 = vld [vmem:[%s173 + $0x10] sm:$0xff]
        %v179 = vld [vmem:[%s173 + $0x18] sm:$0xff]
        %v180 = vld [vmem:[%s2] sm:$0xff]
        %v181 = vld [vmem:[%s2 + $0x8] sm:$0xff]
        %v182 = vld [vmem:[%s2 + $0x10] sm:$0xff]
        %v183 = vld [vmem:[%s2 + $0x18] sm:$0xff]
        %v184 = vld [vmem:[%s2 + $0x20] sm:$0xff]
        %v185 = vld [vmem:[%s2 + $0x28] sm:$0xff]
        %v186 = vld [vmem:[%s2 + $0x30] sm:$0xff]
        %v187 = vld [vmem:[%s2 + $0x38] sm:$0xff]
        %v188 = vld [vmem:[%s2 + $0x40] sm:$0xff]
        %v189 = vld [vmem:[%s2 + $0x48] sm:$0xff]
        %v190 = vld [vmem:[%s2 + $0x50] sm:$0xff]
        %v191 = vld [vmem:[%s2 + $0x58] sm:$0xff]
        %v192 = vld [vmem:[%s2 + $0x60] sm:$0xff]
        %v193 = vld [vmem:[%s2 + $0x68] sm:$0xff]
        %v194 = vld [vmem:[%s2 + $0x70] sm:$0xff]
        %v195 = vld [vmem:[%s2 + $0x78] sm:$0xff]
        %v196 = vld [vmem:[%s2 + $0x80] sm:$0xff]
        %v197 = vld [vmem:[%s2 + $0x88] sm:$0xff]
        %v198 = vld [vmem:[%s2 + $0x90] sm:$0xff]
        %v199 = vld [vmem:[%s2 + $0x98] sm:$0xff]
        %v200 = vld [vmem:[%s2 + $0xa0] sm:$0xff]
        %v201 = vld [vmem:[%s2 + $0xa8] sm:$0xff]
        %v202 = vld [vmem:[%s2 + $0xb0] sm:$0xff]
        %v203 = vld [vmem:[%s2 + $0xb8] sm:$0xff]
        %v204 = vld [vmem:[%s2 + $0xc0] sm:$0xff]
        %v205 = vld [vmem:[%s2 + $0xc8] sm:$0xff]
        %v206 = vld [vmem:[%s2 + $0xd0] sm:$0xff]
        %v207 = vld [vmem:[%s2 + $0xd8] sm:$0xff]
        %v208 = vld [vmem:[%s2 + $0xe0] sm:$0xff]
        %v209 = vld [vmem:[%s2 + $0xe8] sm:$0xff]
        %v210 = vld [vmem:[%s2 + $0xf0] sm:$0xff]
        %v211 = vld [vmem:[%s2 + $0xf8] sm:$0xff]
        %s212 = sld [smem:[#allocation2]]
        %v213 = vstv %s212
        %214 = vmatprep.subr.mxu0 0.0
        %215 = vmatpush1.msra.mxu0 %v180
        %216 = vmatprep.subr.mxu0 0.0
        %217 = vmatpush1.msra.mxu0 %v181
        %218 = vmatprep.subr.mxu0 0.0
        %219 = vmatpush1.msra.mxu0 %v182
        %220 = vmatprep.subr.mxu0 0.0
        %221 = vmatpush1.msra.mxu0 %v183
        %222 = vmatprep.subr.mxu0 0.0
        %223 = vmatpush1.msra.mxu0 %v184
        %224 = vmatprep.subr.mxu0 0.0
        %225 = vmatpush1.msra.mxu0 %v185
        %226 = vmatprep.subr.mxu0 0.0
        %227 = vmatpush1.msra.mxu0 %v186
        %228 = vmatprep.subr.mxu0 0.0
        %229 = vmatpush1.msra.mxu0 %v187
        %230 = vmatprep.subr.mxu0 0.0
        %231 = vmatpush1.msra.mxu0 %v188
        %232 = vmatprep.subr.mxu0 0.0
        %233 = vmatpush1.msra.mxu0 %v189
        %234 = vmatprep.subr.mxu0 0.0
        %235 = vmatpush1.msra.mxu0 %v190
        %236 = vmatprep.subr.mxu0 0.0
        %237 = vmatpush1.msra.mxu0 %v191
        %238 = vmatprep.subr.mxu0 0.0
        %239 = vmatpush1.msra.mxu0 %v192
        %240 = vmatprep.subr.mxu0 0.0
        %241 = vmatpush1.msra.mxu0 %v193
        %242 = vmatprep.subr.mxu0 0.0
        %243 = vmatpush1.msra.mxu0 %v194
        %244 = vmatprep.subr.mxu0 0.0
        %245 = vmatpush1.msra.mxu0 %v195
        %246 = vmatprep.subr.mxu0 0.0
        %247 = vmatpush1.msra.mxu0 %v196
        %248 = vmatprep.subr.mxu0 0.0
        %249 = vmatpush1.msra.mxu0 %v197
        %250 = vmatprep.subr.mxu0 0.0
        %251 = vmatpush1.msra.mxu0 %v198
        %252 = vmatprep.subr.mxu0 0.0
        %253 = vmatpush1.msra.mxu0 %v199
        %254 = vmatprep.subr.mxu0 0.0
        %255 = vmatpush1.msra.mxu0 %v200
        %256 = vmatprep.subr.mxu0 0.0
        %257 = vmatpush1.msra.mxu0 %v201
        %258 = vmatprep.subr.mxu0 0.0
        %259 = vmatpush1.msra.mxu0 %v202
        %260 = vmatprep.subr.mxu0 0.0
        %261 = vmatpush1.msra.mxu0 %v203
        %262 = vmatprep.subr.mxu0 0.0
        %263 = vmatpush1.msra.mxu0 %v204
        %264 = vmatprep.subr.mxu0 0.0
        %265 = vmatpush1.msra.mxu0 %v205
        %266 = vmatprep.subr.mxu0 0.0
        %267 = vmatpush1.msra.mxu0 %v206
        %268 = vmatprep.subr.mxu0 0.0
        %269 = vmatpush1.msra.mxu0 %v207
        %270 = vmatprep.subr.mxu0 0.0
        %271 = vmatpush1.msra.mxu0 %v208
        %272 = vmatprep.subr.mxu0 0.0
        %273 = vmatpush1.msra.mxu0 %v209
        %274 = vmatprep.subr.mxu0 0.0
        %275 = vmatpush1.msra.mxu0 %v210
        %276 = vmatprep.subr.mxu0 0.0
        %277 = vmatpush1.msra.mxu0 %v211
        %278 = vmatprep.mubr.f32.mxu0 %v177
        %279 = vmatmul.mubr.f32.gmra.mrb[0].mxu0 %v176
        %v280 = vpop.f32.mrb[0].mxu0
        %v281 = vadd.f32 %v213, %v280
        %v282 = vpop.f32.mrb[0].mxu0
        %283 = vmatprep.mubr.f32.mxu0 %v179
        %284 = vmatmul.mubr.f32.gmra.mrb[0].mxu0 %v178
        %v285 = vpop.f32.mrb[0].mxu0
        %v286 = vadd.f32 %v213, %v285
        %v287 = vpop.f32.mrb[0].mxu0
        %288 = vdwg.mxu0
        %289 = vst [vmem:[%s167] sm:$0xff] %v281
        %290 = vst [vmem:[%s167 + $0x8] sm:$0xff] %v286
        %s291 = sand.u32 %s94, 1
        %s292 = scalar_lea.sflag [#allocation4], %s291
        %s293 = sand.u32 %s94, 1
        %s294 = smul.addr %s293, 16
        %s295 = scalar_lea.vmem [#allocation3], %s294
        // Predicated region
        $region33: #{net_forward.1} parent=31 // pred_check
          %p296 = pneg %p104
        $region34: #{net_forward.1} parent=31 // pred_check_branch
          %298 = sbr.rel (%p296) target = $region36
        $region35: #{net_forward.1} parent=31 // pred_region
          %s299 = smul.u32 2, %s18
          %s301 = ssub.s32 256, 256
          %302 = vsyncadd %s292, %s301
          %s303 = smul.addr %s299, 128
          %s304 = scalar_lea.hbm %s3, %s303
          %s305 = sshll.u32 %s295, 4
          %s306 = int_to_ptr.vmem [resolvable:$true] %s305
          %311 = dma.vmem_to_hbm [thread:$0]  %s306, 256, %s304, %s292, 128, 128, 8
        $region36: #{net_forward.1} parent=31 // pred_fallthru
          _
      $region32: #{net_forward.1} parent=5 // pred_fallthru
        _
      %p312 = scmp.le.s32.totalorder 2, %s13
      // Predicated region
      $region37: #{net_forward.1} parent=5 // pred_check
        %p313 = pneg %p312
      $region38: #{net_forward.1} parent=5 // pred_check_branch
        %315 = sbr.rel (%p313) target = $region40
      $region39: #{net_forward.1} parent=5 // pred_region
        %s316 = ssub.s32 %s13, 2
        // Predicated region
        $region41: #{net_forward.1} parent=39 // pred_check
          %p317 = pneg %p110
        $region42: #{net_forward.1} parent=39 // pred_check_branch
          %319 = sbr.rel (%p317) target = $region44
        $region43: #{net_forward.1} parent=39 // pred_region
          %s320 = sand.u32 %s95, 1
          %s321 = scalar_lea.sflag [#allocation4], %s320
          %s322 = sand.u32 %s95, 1
          %s323 = smul.addr %s322, 16
          %s324 = scalar_lea.vmem [#allocation3], %s323
          %325 = dma.done %s321, 256
        $region44: #{net_forward.1} parent=39 // pred_fallthru
          _
      $region40: #{net_forward.1} parent=5 // pred_fallthru
        _
    $region6: #{net_forward.1} parent=1 // loop_footer
      %s17 = sadd.s32 1, %s13
    $region7: #{net_forward.1} parent=1 // loop_footer_branch
      %12 = sbr.rel target = $region3
    $region8: #{net_forward.1} parent=1 // loop_exit
      _
    %326 = vsyncpa [#allocation4], 1
    %s327 = scalar_lea.sflag [#allocation4], 1
    %328 = vsyncpa %s327, 1

</llo_original>
